<compile_context>
chip_gen: v6e
topology: v6e:2x2x1
jax: 0.10.0
libtpu: 0.0.40
codegen_flags: <defaults>
</compile_context>

<pallas_src>
import numpy as np

import jax
import jax.numpy as jnp
from jax.experimental import pallas as pl
from jax.experimental.pallas import tpu as pltpu


def _window_matrix(L: int, kernel_size: int, stride: int, pad: int,
                   l_out: int) -> np.ndarray:
    """(L, l_out) f32 matrix folding replicate-padding + stride + 1/k mean."""
    taps = (np.arange(l_out)[:, None] * stride
            + np.arange(kernel_size)[None, :] - pad)          # (l_out, k)
    taps = np.clip(taps, 0, L - 1)
    m = np.zeros((L, l_out), np.float32)
    cols = np.repeat(np.arange(l_out), kernel_size)
    np.add.at(m, (taps.reshape(-1), cols), 1.0)
    m *= 1.0 / kernel_size
    return m


def _pick_tile(total: int, granule: int, max_tile: int) -> int:
    """Largest multiple of `granule` dividing `total`, capped at `max_tile`;
    falls back to the full extent (always a legal block shape)."""
    if total <= max_tile:
        return total
    t = (max_tile // granule) * granule
    while t >= granule:
        if total % t == 0:
            return t
        t -= granule
    return total


def _moving_avg_kernel(x_ref, m_ref, o_ref):
    """x_ref: (Rt, L)  m_ref: (L, Lt)  o_ref: (Rt, Lt).

    One MXU matmul per grid step; f32 accumulation; single lane-dense store.
    """
    o_ref[...] = jnp.dot(
        x_ref[...], m_ref[...],
        preferred_element_type=jnp.float32,
    ).astype(o_ref.dtype)


def moving_avg(x: jax.Array, kernel_size: int, stride: int) -> jax.Array:
    """Equivalent of _Moving_Avg.forward for x of shape (B, L, C)."""
    B, L, C = x.shape
    pad = (kernel_size - 1) // 2
    l_out = (L + 2 * pad - kernel_size) // stride + 1

    # Static banded averaging matrix (padding + stride + 1/k folded in).
    m_np = _window_matrix(L, kernel_size, stride, pad, l_out)  # (L, l_out)

    # Layout plumbing (wrapper-side): time on the lane axis, (B,C) on sublanes.
    x2 = jnp.transpose(x, (0, 2, 1)).reshape(B * C, L)         # (R, L)
    R = B * C

    # Pick matmul operand dtypes: native bf16 MXU path when the input is bf16,
    # otherwise do the whole thing in f32.
    if x.dtype == jnp.bfloat16:
        x_in = x2
        m_in = jnp.asarray(m_np, dtype=jnp.bfloat16)
        in_bytes = 2
    else:
        x_in = x2.astype(jnp.float32) if x2.dtype != jnp.float32 else x2
        m_in = jnp.asarray(m_np, dtype=jnp.float32)
        in_bytes = 4

    r_tile = _pick_tile(R, 8, 512)          # sublane-axis tile
    t_tile = _pick_tile(l_out, 128, 1024)   # lane-axis (output time) tile
    grid = (R // r_tile, l_out // t_tile)

    # Double-buffered in/out blocks (+1 MiB slack); explicit limit keeps the
    # tile sizing honest against v7x's 64 MiB VMEM as well.
    out_bytes = jnp.dtype(x.dtype).itemsize
    vmem_need = (2 * in_bytes * (r_tile * L + L * t_tile)
                 + 2 * out_bytes * (r_tile * t_tile) + (1 << 20))
    vmem_limit = int(min(max(vmem_need, 32 * 1024 * 1024), 100 * 1024 * 1024))

    out2 = pl.pallas_call(
        _moving_avg_kernel,
        out_shape=jax.ShapeDtypeStruct((R, l_out), x.dtype),
        grid_spec=pltpu.PrefetchScalarGridSpec(
            num_scalar_prefetch=0,
            grid=grid,
            in_specs=[
                pl.BlockSpec((r_tile, L), lambda r, t: (r, 0)),
                pl.BlockSpec((L, t_tile), lambda r, t: (0, t)),
            ],
            out_specs=pl.BlockSpec((r_tile, t_tile), lambda r, t: (r, t)),
        ),
        compiler_params=pltpu.CompilerParams(
            dimension_semantics=("parallel", "parallel"),
            vmem_limit_bytes=vmem_limit,
        ),
    )(x_in, m_in)

    # Back to the module's (B, L_out, C) layout (wrapper glue).
    return jnp.transpose(out2.reshape(B, C, l_out), (0, 2, 1))


def _moving_avg_ref(x, kernel_size, stride):
    """Pure-JAX reference mirroring the PyTorch module exactly."""
    pad = (kernel_size - 1) // 2
    front = jnp.repeat(x[:, 0:1, :], pad, axis=1)
    end = jnp.repeat(x[:, -1:, :], pad, axis=1)
    xp = jnp.concatenate([front, x, end], axis=1)             # (B, L_pad, C)
    L_pad = xp.shape[1]
    n_out = (L_pad - kernel_size) // stride + 1
    wins = jnp.stack(
        [xp[:, t * stride:t * stride + kernel_size, :].mean(axis=1)
         for t in range(n_out)], axis=1)
    return wins


if __name__ == "__main__":
    key = jax.random.PRNGKey(0)

    # Primary small config: _Moving_Avg(kernel_size=5, stride=1) on (2, 16, 8).
    B, L, C = 2, 16, 8
    kernel_size, stride = 5, 1
    x = jax.random.normal(key, (B, L, C), dtype=jnp.float32)

    y = jax.block_until_ready(moving_avg(x, kernel_size, stride))
    y_ref = _moving_avg_ref(x, kernel_size, stride)
    assert y.shape == y_ref.shape, (y.shape, y_ref.shape)
    assert jnp.allclose(y, y_ref, atol=1e-5, rtol=1e-5), "mismatch vs reference"

    # Extra configs: DLinear-typical kernel size, odd channel count, stride > 1,
    # and a bf16 input exercising the bf16 MXU path.
    for (B2, L2, C2, k2, s2, dt) in [
        (2, 96, 7, 25, 1, jnp.float32),
        (1, 64, 7, 25, 2, jnp.float32),
        (2, 96, 7, 25, 1, jnp.bfloat16),
    ]:
        x2 = jax.random.normal(jax.random.PRNGKey(1), (B2, L2, C2),
                               jnp.float32).astype(dt)
        y2 = jax.block_until_ready(moving_avg(x2, k2, s2))
        y2_ref = _moving_avg_ref(x2.astype(jnp.float32), k2, s2)
        tol = 1e-5 if dt == jnp.float32 else 2e-2
        assert y2.shape == y2_ref.shape, (y2.shape, y2_ref.shape)
        assert jnp.allclose(y2.astype(jnp.float32), y2_ref,
                            atol=tol, rtol=tol), \
            f"mismatch vs reference for {(B2, L2, C2, k2, s2, dt)}"

    print("KERNEL_OK")
</pallas_src>

<mosaic_0001>
module attributes {stable_mosaic.version = 11 : i64} {
  func.func @_moving_avg_kernel(%arg0: i32, %arg1: i32, %arg2: memref<16x16xf32, #tpu.memory_space<vmem>>, %arg3: memref<16x16xf32, #tpu.memory_space<vmem>>, %arg4: memref<16x16xf32, #tpu.memory_space<vmem>>) attributes {dimension_semantics = [#tpu.dimension_semantics<parallel>, #tpu.dimension_semantics<parallel>], iteration_bounds = array<i64: 1, 1>, scalar_prefetch = 0 : i64, scratch_operands = 0 : i64, tpu.core_type = #tpu.core_type<tc>, window_params = [{transform_indices = @transform_0, window_bounds = array<i64: 16, 16>}, {transform_indices = @transform_1, window_bounds = array<i64: 16, 16>}, {transform_indices = @transform_2, window_bounds = array<i64: 16, 16>}]} {
    %c0 = arith.constant 0 : index
    %c0_0 = arith.constant 0 : index
    %0 = vector.load %arg2[%c0, %c0_0] : memref<16x16xf32, #tpu.memory_space<vmem>>, vector<16x16xf32>
    %c0_1 = arith.constant 0 : index
    %c0_2 = arith.constant 0 : index
    %1 = vector.load %arg3[%c0_1, %c0_2] : memref<16x16xf32, #tpu.memory_space<vmem>>, vector<16x16xf32>
    %cst = arith.constant dense<0.000000e+00> : vector<16x16xf32>
    %2 = tpu.matmul %0, %1, %cst {dimension_numbers = #tpu.dot_dimension_numbers<[1], [0], [0], [1], [0, 0, 1, 1], [], []>} : vector<16x16xf32>, vector<16x16xf32>, vector<16x16xf32> -> vector<16x16xf32>
    %c0_3 = arith.constant 0 : index
    %c0_4 = arith.constant 0 : index
    %3 = vector.load %arg4[%c0_3, %c0_4] : memref<16x16xf32, #tpu.memory_space<vmem>>, vector<16x16xf32>
    tpu.vector_store %arg4[%c0_3, %c0_4], %2 {strides = array<i32>} : memref<16x16xf32, #tpu.memory_space<vmem>>, vector<16x16xf32>,
    return
  }
  func.func @transform_0(%arg0: i32, %arg1: i32) -> (i32, i32) {
    %c0_i32 = arith.constant 0 : i32
    %c0_i32_0 = arith.constant 0 : i32
    return %arg0, %c0_i32 : i32, i32
  }
  func.func @transform_1(%arg0: i32, %arg1: i32) -> (i32, i32) {
    %c0_i32 = arith.constant 0 : i32
    %c0_i32_0 = arith.constant 0 : i32
    return %c0_i32, %arg1 : i32, i32
  }
  func.func @transform_2(%arg0: i32, %arg1: i32) -> (i32, i32) {
    %c0_i32 = arith.constant 0 : i32
    return %arg0, %arg1 : i32, i32
  }
}

</mosaic_0001>

<llo_original>
// kernel: tpu_custom_call.1
$region0: #{tpu_custom_call.1}
  #allocation0 [shape = 'u32[]', space=smem, size = 0x4, offset = 0x4, fixed_abs, tag = 'smem constant byte address 0x4 - core index']
  #allocation1 [shape = 'u32[144,128]{1,0:T(1,128)}', space=vmem, size = 0x12000, scoped, tag = 'internal scratch']
  %s0 = inlined_call_operand.hbm [shape: f32[16,16], index: 0, kind: input, shape index: {}]
  %s1 = inlined_call_operand.hbm [shape: f32[16,16], index: 1, kind: input, shape index: {}]
  %s2 = inlined_call_operand.hbm [shape: f32[16,16], index: 2, kind: output, shape index: {}]
  %s3 = sld [smem:[#allocation0]]
  $region26: #{tpu_custom_call.1} parent=0
    _
  %s5 = ssub.s32 1, %s3
  %s6 = scalar_select 0, %s5, %s3
  $region1: #{tpu_custom_call.1} parent=0
    #allocation2 [shape = 'u8[8192]{0}', space=vmem, size = 0x2000, scoped, tag = 'input window, operand 0, single buffered']
    #allocation3 [shape = 's32[1]{0}', space=sflag, size = 0x4, scoped, tag = 'scoped memory for tpu_custom_call.1']
    #allocation4 [shape = 's32[1]{0}', space=sflag, size = 0x4, scoped, tag = 'scoped memory for tpu_custom_call.1']
    #allocation5 [shape = 'u8[8192]{0}', space=vmem, size = 0x2000, scoped, tag = 'input window, operand 1, single buffered']
    #allocation6 [shape = 's32[1]{0}', space=sflag, size = 0x4, scoped, tag = 'scoped memory for tpu_custom_call.1']
    #allocation7 [shape = 'u8[8192]{0}', space=vmem, size = 0x2000, scoped, tag = 'output window, operand 0, single buffered']
    %7 = vsyncpa [#allocation3], 0
    %8 = vsyncpa [#allocation6], 0
    %9 = vsyncpa [#allocation4], 0
    // Predicated region
    $region2: #{tpu_custom_call.1} parent=1 // pred_check
      _
    $region3: #{tpu_custom_call.1} parent=1 // pred_check_branch
      %11 = sbr.rel (0) target = $region5
    $region4: #{tpu_custom_call.1} parent=1 // pred_region
      %s13 = ssub.s32 256, 256
      %14 = vsyncadd [#allocation3], %s13
      %s15 = sshll.u32 [#allocation2], 4
      %s16 = int_to_ptr.vmem [resolvable:$true] %s15
      %21 = dma.hbm_to_vmem [thread:$0]  %s0, 256, %s16, [#allocation3], 128, 128, 8
    $region5: #{tpu_custom_call.1} parent=1 // pred_fallthru
      _
    // Predicated region
    $region6: #{tpu_custom_call.1} parent=1 // pred_check
      _
    $region7: #{tpu_custom_call.1} parent=1 // pred_check_branch
      %23 = sbr.rel (0) target = $region9
    $region8: #{tpu_custom_call.1} parent=1 // pred_region
      %s25 = ssub.s32 256, 256
      %26 = vsyncadd [#allocation6], %s25
      %s27 = sshll.u32 [#allocation5], 4
      %s28 = int_to_ptr.vmem [resolvable:$true] %s27
      %33 = dma.hbm_to_vmem [thread:$0]  %s1, 256, %s28, [#allocation6], 128, 128, 8
    $region9: #{tpu_custom_call.1} parent=1 // pred_fallthru
      _
    // Predicated region
    $region10: #{tpu_custom_call.1} parent=1 // pred_check
      _
    $region11: #{tpu_custom_call.1} parent=1 // pred_check_branch
      %35 = sbr.rel (0) target = $region13
    $region12: #{tpu_custom_call.1} parent=1 // pred_region
      %36 = dma.done [#allocation3], 256
    $region13: #{tpu_custom_call.1} parent=1 // pred_fallthru
      _
    // Predicated region
    $region14: #{tpu_custom_call.1} parent=1 // pred_check
      _
    $region15: #{tpu_custom_call.1} parent=1 // pred_check_branch
      %38 = sbr.rel (0) target = $region17
    $region16: #{tpu_custom_call.1} parent=1 // pred_region
      %39 = dma.done [#allocation6], 256
    $region17: #{tpu_custom_call.1} parent=1 // pred_fallthru
      _
    %v40 = vld [vmem:[#allocation2] sm:$0xff]
    %v41 = vld [vmem:[#allocation2 + $0x8] sm:$0xff]
    %v42 = vld [vmem:[#allocation5] sm:$0xff]
    %v43 = vld [vmem:[#allocation5 + $0x8] sm:$0xff]
    %vm44 = vcmask 130048
    %v46 = vsel %vm44, %v40, 0
    %v49 = vsel %vm44, %v41, 0
    %51 = vmatprep.subr.mxu0 0.0
    %52 = vmatpush1.msra.mxu0 0.0
    %53 = vmatprep.subr.mxu0 0.0
    %54 = vmatpush1.msra.mxu0 0.0
    %55 = vmatprep.subr.mxu0 0.0
    %56 = vmatpush1.msra.mxu0 0.0
    %57 = vmatprep.subr.mxu0 0.0
    %58 = vmatpush1.msra.mxu0 0.0
    %59 = vmatprep.subr.mxu0 0.0
    %60 = vmatpush1.msra.mxu0 0.0
    %61 = vmatprep.subr.mxu0 0.0
    %62 = vmatpush1.msra.mxu0 0.0
    %63 = vmatprep.subr.mxu0 0.0
    %64 = vmatpush1.msra.mxu0 0.0
    %65 = vmatprep.subr.mxu0 0.0
    %66 = vmatpush1.msra.mxu0 0.0
    %67 = vmatprep.subr.mxu0 0.0
    %68 = vmatpush1.msra.mxu0 0.0
    %69 = vmatprep.subr.mxu0 0.0
    %70 = vmatpush1.msra.mxu0 0.0
    %71 = vmatprep.subr.mxu0 0.0
    %72 = vmatpush1.msra.mxu0 0.0
    %73 = vmatprep.subr.mxu0 0.0
    %74 = vmatpush1.msra.mxu0 0.0
    %75 = vmatprep.subr.mxu0 0.0
    %76 = vmatpush1.msra.mxu0 0.0
    %77 = vmatprep.subr.mxu0 0.0
    %78 = vmatpush1.msra.mxu0 0.0
    %79 = vmatprep.subr.mxu0 0.0
    %80 = vmatpush1.msra.mxu0 %v43
    %81 = vmatprep.subr.mxu0 0.0
    %82 = vmatpush1.msra.mxu0 %v42
    %83 = vmatprep.subr.mxu0 0.0
    %84 = vmatpush2.msra.mxu0 0.0
    %85 = vmatprep.subr.mxu0 0.0
    %86 = vmatpush2.msra.mxu0 0.0
    %87 = vmatprep.subr.mxu0 0.0
    %88 = vmatpush2.msra.mxu0 0.0
    %89 = vmatprep.subr.mxu0 0.0
    %90 = vmatpush2.msra.mxu0 0.0
    %91 = vmatprep.subr.mxu0 0.0
    %92 = vmatpush2.msra.mxu0 0.0
    %93 = vmatprep.subr.mxu0 0.0
    %94 = vmatpush2.msra.mxu0 0.0
    %95 = vmatprep.subr.mxu0 0.0
    %96 = vmatpush2.msra.mxu0 0.0
    %97 = vmatprep.subr.mxu0 0.0
    %98 = vmatpush2.msra.mxu0 0.0
    %99 = vmatprep.subr.mxu0 0.0
    %100 = vmatpush2.msra.mxu0 0.0
    %101 = vmatprep.subr.mxu0 0.0
    %102 = vmatpush2.msra.mxu0 0.0
    %103 = vmatprep.subr.mxu0 0.0
    %104 = vmatpush2.msra.mxu0 0.0
    %105 = vmatprep.subr.mxu0 0.0
    %106 = vmatpush2.msra.mxu0 0.0
    %107 = vmatprep.subr.mxu0 0.0
    %108 = vmatpush2.msra.mxu0 0.0
    %109 = vmatprep.subr.mxu0 0.0
    %110 = vmatpush2.msra.mxu0 0.0
    %111 = vmatprep.subr.mxu0 0.0
    %112 = vmatpush2.msra.mxu0 0.0
    %113 = vmatprep.subr.mxu0 0.0
    %114 = vmatpush2.msra.mxu0 0.0
    %115 = vmatprep.mubr.f32.mxu0 0.0
    %116 = vmatmul.mubr.f32.gmra.mxu0 %v46
    %v117 = vpop.f32.mrf.mxu0
    %v118 = vadd.f32 0.0, %v117
    %v119 = vpop.f32.mrf.mxu0
    %120 = vmatprep.mubr.f32.mxu0 0.0
    %121 = vmatmul.mubr.f32.gmra.mxu0 %v49
    %v122 = vpop.f32.mrf.mxu0
    %v123 = vadd.f32 0.0, %v122
    %v124 = vpop.f32.mrf.mxu0
    %125 = vdwg.mxu0
    %126 = vst.msk [vmem:[#allocation7] sm:$0xff] %vm44, %v118
    %127 = vst.msk [vmem:[#allocation7 + $0x8] sm:$0xff] %vm44, %v123
    // Predicated region
    $region18: #{tpu_custom_call.1} parent=1 // pred_check
      _
    $region19: #{tpu_custom_call.1} parent=1 // pred_check_branch
      %129 = sbr.rel (0) target = $region21
    $region20: #{tpu_custom_call.1} parent=1 // pred_region
      %s131 = ssub.s32 256, 256
      %132 = vsyncadd [#allocation4], %s131
      %s133 = sshll.u32 [#allocation7], 4
      %s134 = int_to_ptr.vmem [resolvable:$true] %s133
      %139 = dma.vmem_to_hbm [thread:$0]  %s134, 256, %s2, [#allocation4], 128, 128, 8
    $region21: #{tpu_custom_call.1} parent=1 // pred_fallthru
      _
    // Predicated region
    $region22: #{tpu_custom_call.1} parent=1 // pred_check
      _
    $region23: #{tpu_custom_call.1} parent=1 // pred_check_branch
      %141 = sbr.rel (0) target = $region25
    $region24: #{tpu_custom_call.1} parent=1 // pred_region
      %142 = dma.done [#allocation4], 256
    $region25: #{tpu_custom_call.1} parent=1 // pred_fallthru
      _
    %143 = vsyncpa [#allocation3], 1
    %144 = vsyncpa [#allocation6], 1
    %145 = vsyncpa [#allocation4], 1

</llo_original>
